<compile_context>
chip_gen: v5e
topology: v5e:2x2
jax: 0.10.0
libtpu: 0.0.40
codegen_flags: <defaults>
</compile_context>

<pallas_src>
import jax
import jax.numpy as jnp
from jax.experimental import pallas as pl
from jax.experimental.pallas import tpu as pltpu


def _log_kernel(x_ref, o_ref):
    o_ref[...] = jnp.log(x_ref[...])


def _sublane_pack(itemsize: int) -> int:
    """Rows per packed vreg sublane group: f32 -> 8, bf16/f16 -> 16, fp8/int8 -> 32."""
    return max(8, 32 // itemsize)


def _pick_slab(n: int, itemsize: int, pack: int):
    """Choose (rows, lanes, block_rows) for a lane-dense slab.

    Assumes n % (pack * 128) == 0. Targets ~2 MiB tiles while keeping >= 8 grid
    steps (>= ~4 per TensorCore on v7x) so DMA overlaps compute, and keeps
    block_rows a multiple of the dtype's sublane packing.
    """
    # Widest lane dim such that rows stays a multiple of the sublane pack
    # (unmasked stores, few DMA descriptors). lanes=128 always works given the
    # alignment precondition.
    for lanes in (1024, 512, 256, 128):
        if n % (lanes * pack) == 0:
            break
    rows = n // lanes

    # ~2 MiB byte target per tile (roofline plateau; 2 bufs x (in + out) ~= 8 MiB
    # VMEM, safe under default scoped limits on v5e/v6e/v7x).
    target_bytes = 2 << 20
    target_rows = max(pack, target_bytes // (lanes * itemsize))

    # Keep at least 8 grid steps when the tensor is big enough so v7x gets >= ~4
    # pipelined steps per TensorCore.
    min_steps = 8
    rows_for_min_steps = max(pack, rows // min_steps)

    block_rows = min(target_rows, rows_for_min_steps)
    block_rows = max(pack, (block_rows // pack) * pack)  # multiple of sublane pack
    block_rows = min(block_rows, rows)
    return rows, lanes, block_rows


def pallas_log(x: jax.Array, *, min_elems_for_kernel: int = 65536) -> jax.Array:
    """Pointwise natural log of x. Uses a Pallas TPU kernel for large, nicely
    shaped float tensors; falls back to jnp.log otherwise (identical semantics)."""
    n = x.size
    if n == 0 or not jnp.issubdtype(x.dtype, jnp.floating):
        return jnp.log(x)

    itemsize = jnp.dtype(x.dtype).itemsize
    pack = _sublane_pack(itemsize)

    # Fallback: tiny tensors (launch overhead dominates) or sizes that are not
    # (pack*128)-aligned (padding would cost an extra HBM pass).
    if n < min_elems_for_kernel or n % (pack * 128) != 0:
        return jnp.log(x)

    orig_shape = x.shape
    rows, lanes, block_rows = _pick_slab(n, itemsize, pack)

    # Pure metadata reshape (contiguous flatten) — no pad, no copy.
    x2d = jnp.reshape(x, (rows, lanes))

    out2d = pl.pallas_call(
        _log_kernel,
        out_shape=jax.ShapeDtypeStruct((rows, lanes), x.dtype),
        grid=(pl.cdiv(rows, block_rows),),  # masked partial edge block is fine
        in_specs=[pl.BlockSpec((block_rows, lanes), lambda i: (i, 0))],
        out_specs=pl.BlockSpec((block_rows, lanes), lambda i: (i, 0)),
        compiler_params=pltpu.CompilerParams(
            dimension_semantics=("parallel",),
        ),
        cost_estimate=pl.CostEstimate(
            flops=0,
            transcendentals=n,
            bytes_accessed=2 * n * itemsize,
        ),
    )(x2d)

    return jnp.reshape(out2d, orig_shape)


if __name__ == "__main__":
    key = jax.random.PRNGKey(0)
    k_small, k_large, k_bf16 = jax.random.split(key, 3)

    # 1) Small NCHW input matching the module's typical use (2048 elements ->
    #    fast jnp.log fallback; a Pallas launch is not worth it here).
    x_small = jax.random.uniform(
        k_small, (2, 4, 16, 16), dtype=jnp.float32, minval=0.1, maxval=5.0
    )
    y_small = jax.block_until_ready(pallas_log(x_small))
    assert y_small.shape == x_small.shape and y_small.dtype == x_small.dtype
    assert jnp.allclose(y_small, jnp.log(x_small), rtol=1e-6, atol=1e-6)

    # 2) Larger f32 input exercising the Pallas kernel path
    #    (131072 elements -> (128, 1024) slab, 16x1024 tiles, 8 grid steps).
    x_large = jax.random.uniform(
        k_large, (2, 4, 128, 128), dtype=jnp.float32, minval=0.1, maxval=5.0
    )
    y_large = jax.block_until_ready(pallas_log(x_large))
    assert y_large.shape == x_large.shape and y_large.dtype == x_large.dtype
    assert jnp.allclose(y_large, jnp.log(x_large), rtol=1e-6, atol=1e-6)

    # 3) bf16 input exercising the sublane-pack-aware path (block_rows multiple of 16).
    x_bf16 = jax.random.uniform(
        k_bf16, (2, 4, 128, 128), dtype=jnp.float32, minval=0.1, maxval=5.0
    ).astype(jnp.bfloat16)
    y_bf16 = jax.block_until_ready(pallas_log(x_bf16))
    assert y_bf16.shape == x_bf16.shape and y_bf16.dtype == x_bf16.dtype
    assert jnp.allclose(
        y_bf16.astype(jnp.float32),
        jnp.log(x_bf16).astype(jnp.float32),
        rtol=1e-2, atol=1e-2,
    )

    print("KERNEL_OK")
</pallas_src>

<mosaic_0001>
module attributes {stable_mosaic.version = 11 : i64} {
  func.func @_log_kernel(%arg0: i32, %arg1: memref<16x1024xf32, #tpu.memory_space<vmem>>, %arg2: memref<16x1024xf32, #tpu.memory_space<vmem>>) attributes {dimension_semantics = [#tpu.dimension_semantics<parallel>], iteration_bounds = array<i64: 8>, scalar_prefetch = 0 : i64, scratch_operands = 0 : i64, tpu.core_type = #tpu.core_type<tc>, window_params = [{transform_indices = @transform_0, window_bounds = array<i64: 16, 1024>}, {transform_indices = @transform_1, window_bounds = array<i64: 16, 1024>}]} {
    %c0 = arith.constant 0 : index
    %c0_0 = arith.constant 0 : index
    %0 = vector.load %arg1[%c0, %c0_0] : memref<16x1024xf32, #tpu.memory_space<vmem>>, vector<16x1024xf32>
    %1 = math.log %0 : vector<16x1024xf32>
    %c0_1 = arith.constant 0 : index
    %c0_2 = arith.constant 0 : index
    %2 = vector.load %arg2[%c0_1, %c0_2] : memref<16x1024xf32, #tpu.memory_space<vmem>>, vector<16x1024xf32>
    tpu.vector_store %arg2[%c0_1, %c0_2], %1 {strides = array<i32>} : memref<16x1024xf32, #tpu.memory_space<vmem>>, vector<16x1024xf32>,
    return
  }
  func.func @transform_0(%arg0: i32) -> (i32, i32) {
    %c0_i32 = arith.constant 0 : i32
    %c0_i32_0 = arith.constant 0 : i32
    return %arg0, %c0_i32 : i32, i32
  }
  func.func @transform_1(%arg0: i32) -> (i32, i32) {
    %c0_i32 = arith.constant 0 : i32
    %c0_i32_0 = arith.constant 0 : i32
    return %arg0, %c0_i32 : i32, i32
  }
}

</mosaic_0001>

<llo_original>
// kernel: tpu_custom_call.1
$region0: #{tpu_custom_call.1}
  #allocation0 [shape = 'u32[]', space=smem, size = 0x4, offset = 0x4, fixed_abs, tag = 'smem constant byte address 0x4 - core index']
  #allocation1 [shape = 'u32[72,128]{1,0:T(1,128)}', space=vmem, size = 0x9000, scoped, tag = 'internal scratch']
  %s0 = inlined_call_operand.hbm [shape: f32[128,1024], index: 0, kind: input, shape index: {}]
  %s1 = inlined_call_operand.hbm [shape: f32[128,1024], index: 1, kind: output, shape index: {}]
  %s2 = sld [smem:[#allocation0]]
  $region41: #{tpu_custom_call.1} parent=0
    _
  %s4 = ssub.s32 1, %s2
  %s5 = scalar_select 0, %s4, %s2
  $region1: #{tpu_custom_call.1} parent=0
    #allocation2 [shape = 'u8[131072]{0}', space=vmem, size = 0x20000, scoped, tag = 'input window, operand 0']
    #allocation3 [shape = 's32[2]{0}', space=sflag, size = 0x8, scoped, tag = 'scoped memory for tpu_custom_call.1']
    #allocation4 [shape = 's32[2]{0}', space=sflag, size = 0x8, scoped, tag = 'scoped memory for tpu_custom_call.1']
    #allocation5 [shape = 'u8[131072]{0}', space=vmem, size = 0x20000, scoped, tag = 'output window, operand 0']
    %6 = vsyncpa [#allocation3], 0
    %s7 = scalar_lea.sflag [#allocation3], 1
    %8 = vsyncpa %s7, 0
    %9 = vsyncpa [#allocation4], 0
    %s10 = scalar_lea.sflag [#allocation4], 1
    %11 = vsyncpa %s10, 0
    loop: start=0, step=1, limit=10
    $region2: #{tpu_custom_call.1} parent=1 // loop_pre_header
      _
    $region3: #{tpu_custom_call.1} parent=1 // loop_header
      %s13 = sphi 0, %s17
      %p14 = scmp.ge.s32.totalorder %s13, 10
      %s23 = sphi 0, %s25
      %s26 = sphi 0, %s23
      %s27 = sphi 0, %s26
      %s43 = sphi 0, %s27
      %s49 = sphi 0, %s51
      %s52 = sphi 0, %s49
      %s53 = sphi 0, %s52
      %s69 = sphi 0, %s53
    $region4: #{tpu_custom_call.1} parent=1 // loop_header_branch
      %16 = sbr.rel (%p14) target = $region8
    $region5: #{tpu_custom_call.1} parent=1 // loop_body
      %s18 = ssub.s32 %s13, 1
      %s19 = ssub.s32 %s13, 2
      %s20 = sadd.s32 %s13, 1
      %s21 = ssub.s32 %s13, %s20
      %p22 = scmp.eq.s32.totalorder %s21, 0
      %s24 = sadd.s32 %s23, 1
      %s25 = scalar_select %p22, %s23, %s24
      %p28 = pneg %p22
      %p29 = scmp.eq.s32.totalorder %s13, 7
      %p30 = por %p28, %p29
      %p31 = scmp.ne.s32.totalorder %s23, %s26
      %p32 = scmp.eq.s32.totalorder %s13, 0
      %p33 = por %p31, %p32
      %p34 = scmp.ne.s32.totalorder %s23, %s26
      %p35 = scmp.eq.s32.totalorder %s18, 7
      %p36 = por %p34, %p35
      %p37 = scmp.ne.s32.totalorder %s26, %s27
      %p38 = scmp.eq.s32.totalorder %s18, 0
      %p39 = por %p37, %p38
      %p40 = scmp.ne.s32.totalorder %s26, %s27
      %p41 = scmp.eq.s32.totalorder %s19, 7
      %p42 = por %p40, %p41
      %p44 = scmp.ne.s32.totalorder %s27, %s43
      %p45 = scmp.eq.s32.totalorder %s19, 0
      %p46 = por %p44, %p45
      %s47 = ssub.s32 %s13, %s20
      %p48 = scmp.eq.s32.totalorder %s47, 0
      %s50 = sadd.s32 %s49, 1
      %s51 = scalar_select %p48, %s49, %s50
      %p54 = pneg %p48
      %p55 = scmp.eq.s32.totalorder %s13, 7
      %p56 = por %p54, %p55
      %p57 = scmp.ne.s32.totalorder %s49, %s52
      %p58 = scmp.eq.s32.totalorder %s13, 0
      %p59 = por %p57, %p58
      %p60 = scmp.ne.s32.totalorder %s49, %s52
      %p61 = scmp.eq.s32.totalorder %s18, 7
      %p62 = por %p60, %p61
      %p63 = scmp.ne.s32.totalorder %s52, %s53
      %p64 = scmp.eq.s32.totalorder %s18, 0
      %p65 = por %p63, %p64
      %p66 = scmp.ne.s32.totalorder %s52, %s53
      %p67 = scmp.eq.s32.totalorder %s19, 7
      %p68 = por %p66, %p67
      %p70 = scmp.ne.s32.totalorder %s53, %s69
      %p71 = scmp.eq.s32.totalorder %s19, 0
      %p72 = por %p70, %p71
      %p73 = scmp.le.s32.totalorder 1, %s13
      %p74 = scmp.lt.s32.totalorder %s13, 9
      %p75 = pnand %p73, %p74
      %p76 = pneg %p75
      // Predicated region
      $region9: #{tpu_custom_call.1} parent=5 // pred_check
        _
      $region10: #{tpu_custom_call.1} parent=5 // pred_check_branch
        %78 = sbr.rel (%p75) target = $region12
      $region11: #{tpu_custom_call.1} parent=5 // pred_region
        %s79 = ssub.s32 %s13, 1
      $region12: #{tpu_custom_call.1} parent=5 // pred_fallthru
        _
      %p80 = scmp.lt.s32.totalorder %s13, 8
      // Predicated region
      $region13: #{tpu_custom_call.1} parent=5 // pred_check
        %p81 = pneg %p80
      $region14: #{tpu_custom_call.1} parent=5 // pred_check_branch
        %83 = sbr.rel (%p81) target = $region16
      $region15: #{tpu_custom_call.1} parent=5 // pred_region
        // Predicated region
        $region17: #{tpu_custom_call.1} parent=15 // pred_check
          %p84 = pneg %p33
        $region18: #{tpu_custom_call.1} parent=15 // pred_check_branch
          %86 = sbr.rel (%p84) target = $region20
        $region19: #{tpu_custom_call.1} parent=15 // pred_region
          %s87 = sand.u32 %s23, 1
          %s88 = scalar_lea.sflag [#allocation3], %s87
          %s89 = sand.u32 %s23, 1
          %s90 = smul.addr %s89, 128
          %s91 = scalar_lea.vmem [#allocation2], %s90
          %s92 = smul.u32 2, %s13
          %94 = vsyncadd %s88, 0
          %s95 = smul.addr %s92, 8
          %s96 = smul.addr %s95, 8
          %s97 = scalar_lea.hbm %s0, %s96
          %s98 = sshll.u32 %s97, 4
          %s99 = int_to_ptr.hbm [resolvable:$true] %s98
          %s100 = sshll.u32 %s91, 4
          %s101 = int_to_ptr.vmem [resolvable:$true] %s100
          %106 = dma.hbm_to_vmem [thread:$0]  %s99, 2048, %s101, %s88, 1024, 1024, 64
        $region20: #{tpu_custom_call.1} parent=15 // pred_fallthru
          _
      $region16: #{tpu_custom_call.1} parent=5 // pred_fallthru
        _
      %p107 = scmp.le.s32.totalorder 1, %s13
      %p108 = scmp.lt.s32.totalorder %s13, 9
      %p109 = pnand %p107, %p108
      %p110 = pneg %p109
      // Predicated region
      $region21: #{tpu_custom_call.1} parent=5 // pred_check
        _
      $region22: #{tpu_custom_call.1} parent=5 // pred_check_branch
        %112 = sbr.rel (%p109) target = $region24
      $region23: #{tpu_custom_call.1} parent=5 // pred_region
        %s113 = ssub.s32 %s13, 1
        %s114 = sand.u32 %s26, 1
        %s115 = scalar_lea.sflag [#allocation3], %s114
        %s116 = sand.u32 %s26, 1
        %s117 = smul.addr %s116, 128
        %s118 = scalar_lea.vmem [#allocation2], %s117
        // Predicated region
        $region25: #{tpu_custom_call.1} parent=23 // pred_check
          %p119 = pneg %p39
        $region26: #{tpu_custom_call.1} parent=23 // pred_check_branch
          %121 = sbr.rel (%p119) target = $region28
        $region27: #{tpu_custom_call.1} parent=23 // pred_region
          %123 = dma.done %s115, 2048
        $region28: #{tpu_custom_call.1} parent=23 // pred_fallthru
          _
        %s124 = sand.u32 %s26, 1
        %s125 = scalar_lea.sflag [#allocation3], %s124
        %s126 = sand.u32 %s26, 1
        %s127 = smul.addr %s126, 128
        %s128 = scalar_lea.vmem [#allocation2], %s127
        %p129 = pneg %p39
        %p130 = pneg %p36
        %p131 = pneg %p65
        %p132 = pneg %p62
        %s133 = sand.u32 %s52, 1
        %s134 = scalar_lea.sflag [#allocation4], %s133
        %s135 = sand.u32 %s52, 1
        %s136 = smul.addr %s135, 128
        %s137 = scalar_lea.vmem [#allocation5], %s136
        %s138 = smul.u32 2, %s18
        %s139 = smul.u32 2, %s18
        %v140 = vld [vmem:[%s118] sm:$0xff]
        %v141 = vld [vmem:[%s118 + $0x8] sm:$0xff]
        %v142 = vld [vmem:[%s118 + $0x10] sm:$0xff]
        %v143 = vld [vmem:[%s118 + $0x18] sm:$0xff]
        %v144 = vld [vmem:[%s118 + $0x20] sm:$0xff]
        %v145 = vld [vmem:[%s118 + $0x28] sm:$0xff]
        %v146 = vld [vmem:[%s118 + $0x30] sm:$0xff]
        %v147 = vld [vmem:[%s118 + $0x38] sm:$0xff]
        %v148 = vld [vmem:[%s118 + $0x40] sm:$0xff]
        %v149 = vld [vmem:[%s118 + $0x48] sm:$0xff]
        %v150 = vld [vmem:[%s118 + $0x50] sm:$0xff]
        %v151 = vld [vmem:[%s118 + $0x58] sm:$0xff]
        %v152 = vld [vmem:[%s118 + $0x60] sm:$0xff]
        %v153 = vld [vmem:[%s118 + $0x68] sm:$0xff]
        %v154 = vld [vmem:[%s118 + $0x70] sm:$0xff]
        %v155 = vld [vmem:[%s118 + $0x78] sm:$0xff]
        %v156 = vlog2.pop %v140
        %v157 = vmul.f32 %v156, 0.6931472
        %v158 = vlog2.pop %v141
        %v159 = vmul.f32 %v158, 0.6931472
        %v160 = vlog2.pop %v142
        %v161 = vmul.f32 %v160, 0.6931472
        %v162 = vlog2.pop %v143
        %v163 = vmul.f32 %v162, 0.6931472
        %v164 = vlog2.pop %v144
        %v165 = vmul.f32 %v164, 0.6931472
        %v166 = vlog2.pop %v145
        %v167 = vmul.f32 %v166, 0.6931472
        %v168 = vlog2.pop %v146
        %v169 = vmul.f32 %v168, 0.6931472
        %v170 = vlog2.pop %v147
        %v171 = vmul.f32 %v170, 0.6931472
        %v172 = vlog2.pop %v148
        %v173 = vmul.f32 %v172, 0.6931472
        %v174 = vlog2.pop %v149
        %v175 = vmul.f32 %v174, 0.6931472
        %v176 = vlog2.pop %v150
        %v177 = vmul.f32 %v176, 0.6931472
        %v178 = vlog2.pop %v151
        %v179 = vmul.f32 %v178, 0.6931472
        %v180 = vlog2.pop %v152
        %v181 = vmul.f32 %v180, 0.6931472
        %v182 = vlog2.pop %v153
        %v183 = vmul.f32 %v182, 0.6931472
        %v184 = vlog2.pop %v154
        %v185 = vmul.f32 %v184, 0.6931472
        %v186 = vlog2.pop %v155
        %v187 = vmul.f32 %v186, 0.6931472
        %188 = vst [vmem:[%s137] sm:$0xff] %v157
        %189 = vst [vmem:[%s137 + $0x8] sm:$0xff] %v159
        %190 = vst [vmem:[%s137 + $0x10] sm:$0xff] %v161
        %191 = vst [vmem:[%s137 + $0x18] sm:$0xff] %v163
        %192 = vst [vmem:[%s137 + $0x20] sm:$0xff] %v165
        %193 = vst [vmem:[%s137 + $0x28] sm:$0xff] %v167
        %194 = vst [vmem:[%s137 + $0x30] sm:$0xff] %v169
        %195 = vst [vmem:[%s137 + $0x38] sm:$0xff] %v171
        %196 = vst [vmem:[%s137 + $0x40] sm:$0xff] %v173
        %197 = vst [vmem:[%s137 + $0x48] sm:$0xff] %v175
        %198 = vst [vmem:[%s137 + $0x50] sm:$0xff] %v177
        %199 = vst [vmem:[%s137 + $0x58] sm:$0xff] %v179
        %200 = vst [vmem:[%s137 + $0x60] sm:$0xff] %v181
        %201 = vst [vmem:[%s137 + $0x68] sm:$0xff] %v183
        %202 = vst [vmem:[%s137 + $0x70] sm:$0xff] %v185
        %203 = vst [vmem:[%s137 + $0x78] sm:$0xff] %v187
        %s204 = sand.u32 %s52, 1
        %s205 = scalar_lea.sflag [#allocation4], %s204
        %s206 = sand.u32 %s52, 1
        %s207 = smul.addr %s206, 128
        %s208 = scalar_lea.vmem [#allocation5], %s207
        // Predicated region
        $region29: #{tpu_custom_call.1} parent=23 // pred_check
          %p209 = pneg %p62
        $region30: #{tpu_custom_call.1} parent=23 // pred_check_branch
          %211 = sbr.rel (%p209) target = $region32
        $region31: #{tpu_custom_call.1} parent=23 // pred_region
          %s212 = smul.u32 2, %s18
          %214 = vsyncadd %s205, 0
          %s215 = smul.addr %s212, 8
          %s216 = smul.addr %s215, 8
          %s217 = scalar_lea.hbm %s1, %s216
          %s218 = sshll.u32 %s208, 4
          %s219 = int_to_ptr.vmem [resolvable:$true] %s218
          %s220 = sshll.u32 %s217, 4
          %s221 = int_to_ptr.hbm [resolvable:$true] %s220
          %226 = dma.vmem_to_hbm [thread:$0]  %s219, 2048, %s221, %s205, 1024, 1024, 64
        $region32: #{tpu_custom_call.1} parent=23 // pred_fallthru
          _
      $region24: #{tpu_custom_call.1} parent=5 // pred_fallthru
        _
      %p227 = scmp.le.s32.totalorder 2, %s13
      // Predicated region
      $region33: #{tpu_custom_call.1} parent=5 // pred_check
        %p228 = pneg %p227
      $region34: #{tpu_custom_call.1} parent=5 // pred_check_branch
        %230 = sbr.rel (%p228) target = $region36
      $region35: #{tpu_custom_call.1} parent=5 // pred_region
        %s231 = ssub.s32 %s13, 2
        // Predicated region
        $region37: #{tpu_custom_call.1} parent=35 // pred_check
          %p232 = pneg %p68
        $region38: #{tpu_custom_call.1} parent=35 // pred_check_branch
          %234 = sbr.rel (%p232) target = $region40
        $region39: #{tpu_custom_call.1} parent=35 // pred_region
          %s235 = sand.u32 %s53, 1
          %s236 = scalar_lea.sflag [#allocation4], %s235
          %s237 = sand.u32 %s53, 1
          %s238 = smul.addr %s237, 128
          %s239 = scalar_lea.vmem [#allocation5], %s238
          %241 = dma.done %s236, 2048
        $region40: #{tpu_custom_call.1} parent=35 // pred_fallthru
          _
      $region36: #{tpu_custom_call.1} parent=5 // pred_fallthru
        _
    $region6: #{tpu_custom_call.1} parent=1 // loop_footer
      %s17 = sadd.s32 1, %s13
    $region7: #{tpu_custom_call.1} parent=1 // loop_footer_branch
      %12 = sbr.rel target = $region3
    $region8: #{tpu_custom_call.1} parent=1 // loop_exit
      _
    %242 = vsyncpa [#allocation3], 1
    %s243 = scalar_lea.sflag [#allocation3], 1
    %244 = vsyncpa %s243, 1
    %245 = vsyncpa [#allocation4], 1
    %s246 = scalar_lea.sflag [#allocation4], 1
    %247 = vsyncpa %s246, 1

</llo_original>
